<compile_context>
chip_gen: v5e
topology: v5e:2x2
jax: 0.10.0
libtpu: 0.0.40
codegen_flags: <defaults>
</compile_context>

<pallas_src>
import jax
import jax.numpy as jnp
from jax.experimental import pallas as pl
from jax.experimental.pallas import tpu as pltpu


def attention_kernel(enc_ref, hidp_ref, w1e_ref, w2_ref, ctx_ref):
    bb, S, D = enc_ref.shape

    enc = enc_ref[...]                                     # (bb, S, D) bf16

    # linear1, encoder half, on the MXU: (bb*S, D) @ (D, D) with f32 accum.
    # The reshape is a free relayout when S is a multiple of the bf16 sublane
    # pack (16); otherwise it is a bounded on-chip repack, still correct.
    enc_proj = jnp.dot(enc.reshape(bb * S, D), w1e_ref[...],
                       preferred_element_type=jnp.float32).reshape(bb, S, D)

    # + (hid @ W1h + b1), precomputed once in the wrapper (hoisted matmul).
    t = jnp.tanh(enc_proj + hidp_ref[...].reshape(bb, 1, D))   # (bb, S, D) f32

    # linear2 (D -> 1, no bias) as a lane (XLU) reduction: e[b,s] = sum_d t*w2
    e = jnp.sum(t * w2_ref[...].reshape(1, 1, D), axis=-1)     # (bb, S)

    # numerically stable softmax over the sequence axis (EUP reciprocal)
    e = e - jnp.max(e, axis=-1, keepdims=True)
    p = jnp.exp(e)
    alpha = p * pl.reciprocal(jnp.sum(p, axis=-1, keepdims=True), approx=True)

    # context = sum_s alpha[b,s] * enc[b,s,:]   (f32 alpha × bf16 enc → f32)
    ctx = jnp.sum(alpha[..., None] * enc, axis=1)               # (bb, D) f32
    ctx_ref[...] = ctx.astype(ctx_ref.dtype)


def _pick_block_b(B, S, D, target_bytes):
    """Batch rows per grid step.

    Prefers an 8-aligned divisor of B whose bf16 enc block is near
    `target_bytes` (no jnp.pad copy of enc), and >= 2 grid steps when that is
    possible without shrinking blocks (v7x megacore).  Returns (bb, need_pad).
    """
    if B <= 8:
        return B, False                                   # one full (tiny) block
    cap = min(B, max(8, target_bytes // (S * D * 2)))     # rows per bf16 block
    divs = [d for d in range(8, cap + 1, 8) if B % d == 0]
    if divs:
        two_step = [d for d in divs if d <= B // 2]
        return (max(two_step) if two_step else max(divs)), False
    if B <= cap:
        return B, False                                   # whole batch, one block
    # No aligned divisor fits: pad the batch to a multiple of an aligned block.
    # TODO(synk): clamp-index ragged last block to avoid this HBM copy.
    return (cap // 8) * 8, True


def attention(hidden_state, encoder_outputs, params, *, target_block_bytes=1 << 20):
    """hidden_state (B, D), encoder_outputs (B, S, D) -> context (B, D)."""
    B, S, D = encoder_outputs.shape
    w1, b1, w2 = params["w1"], params["b1"], params["w2"]   # torch layouts

    # Host-side prep (static per call): split W1 into enc/hidden halves,
    # transpose to (K, N), pre-cast the MXU weight to bf16.
    w1e = jnp.asarray(w1[:, :D].T, jnp.bfloat16)             # (D, D) enc half
    w1h = jnp.asarray(w1[:, D:].T, jnp.bfloat16)             # (D, D) hidden half
    b1r = jnp.asarray(b1, jnp.float32).reshape(1, D)
    w2r = jnp.asarray(w2, jnp.float32).reshape(1, D)

    # Dominant HBM tensor in bf16 (halves bandwidth of a memory-bound kernel).
    enc = encoder_outputs.astype(jnp.bfloat16)               # (B, S, D)
    # Hoisted hidden projection: hid @ W1h + b1, computed once per call.
    hid_proj = (jnp.dot(hidden_state.astype(jnp.bfloat16), w1h,
                        preferred_element_type=jnp.float32) + b1r)   # (B, D) f32

    bb, need_pad = _pick_block_b(B, S, D, target_block_bytes)
    if need_pad:
        Bp = pl.cdiv(B, bb) * bb
        enc = jnp.pad(enc, ((0, Bp - B), (0, 0), (0, 0)))
        hid_proj = jnp.pad(hid_proj, ((0, Bp - B), (0, 0)))
    else:
        Bp = B

    # Explicit VMEM budget: double-buffered bf16 enc block + f32 intermediates
    # (enc_proj / tanh / upcast) + small operands, with headroom. Capped well
    # under v7x's 64 MiB physical VMEM; fits v5e/v6e scoped limits too.
    elems = bb * S * D
    vmem_bytes = (4 * elems * 2            # 2x bf16 enc block (double-buffered)
                  + 3 * elems * 4          # f32 intermediates
                  + 4 * bb * D * 4         # hid_proj + ctx blocks (double-buffered)
                  + 2 * D * D * 2          # W1e (double-buffered)
                  + (4 << 20))             # headroom
    vmem_limit = int(min(max(vmem_bytes, 16 << 20), 48 << 20))

    ctx = pl.pallas_call(
        attention_kernel,
        out_shape=jax.ShapeDtypeStruct((Bp, D), jnp.float32),
        grid=(Bp // bb,),
        in_specs=[
            pl.BlockSpec((bb, S, D), lambda i: (i, 0, 0)),   # encoder outputs (bf16)
            pl.BlockSpec((bb, D), lambda i: (i, 0)),         # hid @ W1h + b1  (f32)
            pl.BlockSpec((D, D), lambda i: (0, 0)),          # W1 enc half     (bf16)
            pl.BlockSpec((1, D), lambda i: (0, 0)),          # W2              (f32)
        ],
        out_specs=pl.BlockSpec((bb, D), lambda i: (i, 0)),
        compiler_params=pltpu.CompilerParams(
            dimension_semantics=("parallel",),
            vmem_limit_bytes=vmem_limit),
    )(enc, hid_proj, w1e, w2r)

    return ctx[:B]


def attention_ref(hidden_state, encoder_outputs, params):
    """Pure-JAX reference mirroring the torch forward (bf16 matmul precision)."""
    B, S, D = encoder_outputs.shape
    w1, b1, w2 = params["w1"], params["b1"], params["w2"]
    hid = jnp.repeat(hidden_state[:, None, :], S, axis=1)
    inputs = jnp.concatenate([encoder_outputs, hid], axis=2).reshape(-1, 2 * D)
    o = jnp.tanh(jnp.dot(inputs.astype(jnp.bfloat16), w1.T.astype(jnp.bfloat16),
                         preferred_element_type=jnp.float32) + b1[None, :])
    e = jnp.dot(o, w2.T).reshape(B, S)
    alpha = jax.nn.softmax(e, axis=1)
    return jnp.einsum("bs,bsd->bd", alpha, encoder_outputs)


def init_params(key, dim):
    D = dim
    k1, k2, k3 = jax.random.split(key, 3)
    # xavier_normal_ for linear weights (as in _init_hidden), default bias init
    w1_std = (2.0 / (2 * D + D)) ** 0.5
    w2_std = (2.0 / (D + 1)) ** 0.5
    bbound = 1.0 / (2 * D) ** 0.5
    return dict(
        w1=jax.random.normal(k1, (D, 2 * D), jnp.float32) * w1_std,
        b1=jax.random.uniform(k2, (D,), jnp.float32, -bbound, bbound),
        w2=jax.random.normal(k3, (1, D), jnp.float32) * w2_std,
    )


if __name__ == "__main__":
    B, S, D = 2, 16, 128     # batch, seq_len, dim (lane-dense embedding)

    root = jax.random.PRNGKey(0)
    k_h, k_e, k_p = jax.random.split(root, 3)
    hidden_state = jax.random.normal(k_h, (B, D), jnp.float32)
    encoder_outputs = jax.random.normal(k_e, (B, S, D), jnp.float32)
    params = init_params(k_p, D)

    context = attention(hidden_state, encoder_outputs, params)
    jax.block_until_ready(context)

    assert context.shape == (B, D)
    assert bool(jnp.all(jnp.isfinite(context)))

    ref = attention_ref(hidden_state, encoder_outputs, params)
    max_err = float(jnp.max(jnp.abs(context - ref)))
    assert max_err < 3e-2, f"max abs err {max_err}"

    print("KERNEL_OK")
</pallas_src>

<mosaic_0001>
module attributes {stable_mosaic.version = 11 : i64} {
  func.func @attention_kernel(%arg0: i32, %arg1: memref<2x16x128xbf16, #tpu.memory_space<vmem>>, %arg2: memref<2x128xf32, #tpu.memory_space<vmem>>, %arg3: memref<128x128xbf16, #tpu.memory_space<vmem>>, %arg4: memref<1x128xf32, #tpu.memory_space<vmem>>, %arg5: memref<2x128xf32, #tpu.memory_space<vmem>>) attributes {dimension_semantics = [#tpu.dimension_semantics<parallel>], iteration_bounds = array<i64: 1>, scalar_prefetch = 0 : i64, scratch_operands = 0 : i64, tpu.core_type = #tpu.core_type<tc>, window_params = [{transform_indices = @transform_0, window_bounds = array<i64: 2, 16, 128>}, {transform_indices = @transform_1, window_bounds = array<i64: 2, 128>}, {pipeline_mode = #tpu.pipeline_mode<synchronous>, transform_indices = @transform_2, window_bounds = array<i64: 128, 128>}, {pipeline_mode = #tpu.pipeline_mode<synchronous>, transform_indices = @transform_3, window_bounds = array<i64: 1, 128>}, {transform_indices = @transform_4, window_bounds = array<i64: 2, 128>}]} {
    %c0 = arith.constant 0 : index
    %c0_0 = arith.constant 0 : index
    %c0_1 = arith.constant 0 : index
    %0 = vector.load %arg1[%c0, %c0_0, %c0_1] : memref<2x16x128xbf16, #tpu.memory_space<vmem>>, vector<2x16x128xbf16>
    %1 = vector.shape_cast %0 : vector<2x16x128xbf16> to vector<32x128xbf16>
    %c0_2 = arith.constant 0 : index
    %c0_3 = arith.constant 0 : index
    %2 = vector.load %arg3[%c0_2, %c0_3] : memref<128x128xbf16, #tpu.memory_space<vmem>>, vector<128x128xbf16>
    %cst = arith.constant dense<0.000000e+00> : vector<32x128xf32>
    %3 = tpu.matmul %1, %2, %cst {dimension_numbers = #tpu.dot_dimension_numbers<[1], [0], [0], [1], [0, 0, 1, 1], [], []>} : vector<32x128xbf16>, vector<128x128xbf16>, vector<32x128xf32> -> vector<32x128xf32>
    %4 = vector.shape_cast %3 : vector<32x128xf32> to vector<2x16x128xf32>
    %c0_4 = arith.constant 0 : index
    %c0_5 = arith.constant 0 : index
    %5 = vector.load %arg2[%c0_4, %c0_5] : memref<2x128xf32, #tpu.memory_space<vmem>>, vector<2x128xf32>
    %6 = vector.shape_cast %5 : vector<2x128xf32> to vector<2x1x128xf32>
    %7 = vector.broadcast %6 : vector<2x1x128xf32> to vector<2x16x128xf32>
    %8 = arith.addf %4, %7 : vector<2x16x128xf32>
    %9 = math.tanh %8 : vector<2x16x128xf32>
    %c0_6 = arith.constant 0 : index
    %c0_7 = arith.constant 0 : index
    %10 = vector.load %arg4[%c0_6, %c0_7] : memref<1x128xf32, #tpu.memory_space<vmem>>, vector<1x128xf32>
    %11 = vector.shape_cast %10 : vector<1x128xf32> to vector<1x1x128xf32>
    %12 = vector.broadcast %11 : vector<1x1x128xf32> to vector<2x16x128xf32>
    %13 = arith.mulf %9, %12 : vector<2x16x128xf32>
    %cst_8 = arith.constant dense<0.000000e+00> : vector<2x16xf32>
    %14 = vector.multi_reduction <add>, %13, %cst_8 [2] : vector<2x16x128xf32> to vector<2x16xf32>
    %cst_9 = arith.constant dense<0xFF800000> : vector<2xf32>
    %15 = vector.multi_reduction <maximumf>, %14, %cst_9 [1] : vector<2x16xf32> to vector<2xf32>
    %16 = vector.shape_cast %15 : vector<2xf32> to vector<2x1xf32>
    %17 = vector.broadcast %16 : vector<2x1xf32> to vector<2x16xf32>
    %18 = arith.subf %14, %17 : vector<2x16xf32>
    %19 = math.exp %18 : vector<2x16xf32>
    %cst_10 = arith.constant dense<0.000000e+00> : vector<2xf32>
    %20 = vector.multi_reduction <add>, %19, %cst_10 [1] : vector<2x16xf32> to vector<2xf32>
    %21 = vector.shape_cast %20 : vector<2xf32> to vector<2x1xf32>
    %22 = tpu.reciprocal %21 {approx = true} : vector<2x1xf32> -> vector<2x1xf32>
    %23 = vector.broadcast %22 : vector<2x1xf32> to vector<2x16xf32>
    %24 = arith.mulf %19, %23 : vector<2x16xf32>
    %25 = vector.shape_cast %24 : vector<2x16xf32> to vector<2x16x1xf32>
    %26 = arith.extf %0 : vector<2x16x128xbf16> to vector<2x16x128xf32>
    %27 = vector.broadcast %25 : vector<2x16x1xf32> to vector<2x16x128xf32>
    %28 = arith.mulf %27, %26 : vector<2x16x128xf32>
    %cst_11 = arith.constant dense<0.000000e+00> : vector<2x128xf32>
    %29 = vector.multi_reduction <add>, %28, %cst_11 [1] : vector<2x16x128xf32> to vector<2x128xf32>
    %c0_12 = arith.constant 0 : index
    %c0_13 = arith.constant 0 : index
    %30 = vector.load %arg5[%c0_12, %c0_13] : memref<2x128xf32, #tpu.memory_space<vmem>>, vector<2x128xf32>
    tpu.vector_store %arg5[%c0_12, %c0_13], %29 {strides = array<i32>} : memref<2x128xf32, #tpu.memory_space<vmem>>, vector<2x128xf32>,
    return
  }
  func.func @transform_0(%arg0: i32) -> (i32, i32, i32) {
    %c0_i32 = arith.constant 0 : i32
    %c0_i32_0 = arith.constant 0 : i32
    %c0_i32_1 = arith.constant 0 : i32
    return %arg0, %c0_i32, %c0_i32_0 : i32, i32, i32
  }
  func.func @transform_1(%arg0: i32) -> (i32, i32) {
    %c0_i32 = arith.constant 0 : i32
    %c0_i32_0 = arith.constant 0 : i32
    return %arg0, %c0_i32 : i32, i32
  }
  func.func @transform_2(%arg0: i32) -> (i32, i32) {
    %c0_i32 = arith.constant 0 : i32
    %c0_i32_0 = arith.constant 0 : i32
    %c0_i32_1 = arith.constant 0 : i32
    return %c0_i32, %c0_i32_0 : i32, i32
  }
  func.func @transform_3(%arg0: i32) -> (i32, i32) {
    %c0_i32 = arith.constant 0 : i32
    %c0_i32_0 = arith.constant 0 : i32
    %c0_i32_1 = arith.constant 0 : i32
    return %c0_i32, %c0_i32_0 : i32, i32
  }
  func.func @transform_4(%arg0: i32) -> (i32, i32) {
    %c0_i32 = arith.constant 0 : i32
    %c0_i32_0 = arith.constant 0 : i32
    return %arg0, %c0_i32 : i32, i32
  }
}

</mosaic_0001>

<llo_original>
// kernel: tpu_custom_call.1
$region0: #{tpu_custom_call.1}
  #allocation0 [shape = 'u32[]', space=smem, size = 0x4, offset = 0x4, fixed_abs, tag = 'smem constant byte address 0x4 - core index']
  #allocation1 [shape = 'u32[72,128]{1,0:T(1,128)}', space=vmem, size = 0x9000, scoped, tag = 'internal scratch']
  %s0 = inlined_call_operand.hbm [shape: bf16[2,16,128], index: 0, kind: input, shape index: {}]
  %s1 = inlined_call_operand.hbm [shape: f32[2,128], index: 1, kind: input, shape index: {}]
  %s2 = inlined_call_operand.hbm [shape: bf16[128,128], index: 2, kind: input, shape index: {}]
  %s3 = inlined_call_operand.vmem [shape: f32[1,128], index: 3, kind: input, shape index: {}]
  %s4 = inlined_call_operand.hbm [shape: f32[2,128], index: 4, kind: output, shape index: {}]
  %s5 = sld [smem:[#allocation0]]
  $region38: #{tpu_custom_call.1} parent=0
    _
  %s7 = ssub.s32 1, %s5
  %s8 = scalar_select 0, %s7, %s5
  $region1: #{tpu_custom_call.1} parent=0
    #allocation2 [shape = 'u8[8192]{0}', space=vmem, size = 0x2000, scoped, tag = 'input window, operand 0, single buffered']
    #allocation3 [shape = 's32[1]{0}', space=sflag, size = 0x4, scoped, tag = 'scoped memory for tpu_custom_call.1']
    #allocation4 [shape = 's32[1]{0}', space=sflag, size = 0x4, scoped, tag = 'scoped memory for tpu_custom_call.1']
    #allocation5 [shape = 'u8[1024]{0}', space=vmem, size = 0x400, scoped, tag = 'input window, operand 1, single buffered']
    #allocation6 [shape = 's32[1]{0}', space=sflag, size = 0x4, scoped, tag = 'scoped memory for tpu_custom_call.1']
    #allocation7 [shape = 'u8[32768]{0}', space=vmem, size = 0x8000, scoped, tag = 'input window, operand 2, single buffered']
    #allocation8 [shape = 'u8[1024]{0}', space=vmem, size = 0x400, scoped, tag = 'output window, operand 0, single buffered']
    %9 = vsyncpa [#allocation3], 0
    %10 = vsyncpa [#allocation6], 0
    %11 = vsyncpa [#allocation4], 0
    // Predicated region
    $region2: #{tpu_custom_call.1} parent=1 // pred_check
      _
    $region3: #{tpu_custom_call.1} parent=1 // pred_check_branch
      %13 = sbr.rel (0) target = $region5
    $region4: #{tpu_custom_call.1} parent=1 // pred_region
      %15 = vsyncadd [#allocation3], 0
      %s16 = sshll.u32 %s0, 4
      %s17 = int_to_ptr.hbm [resolvable:$true] %s16
      %s18 = sshll.u32 [#allocation2], 4
      %s19 = int_to_ptr.vmem [resolvable:$true] %s18
      %24 = dma.hbm_to_vmem [thread:$0]  %s17, 256, %s19, [#allocation3], 64, 64, 4
    $region5: #{tpu_custom_call.1} parent=1 // pred_fallthru
      _
    // Predicated region
    $region6: #{tpu_custom_call.1} parent=1 // pred_check
      _
    $region7: #{tpu_custom_call.1} parent=1 // pred_check_branch
      %26 = sbr.rel (0) target = $region9
    $region8: #{tpu_custom_call.1} parent=1 // pred_region
      %28 = vsyncadd [#allocation6], 0
      %s30 = sshll.u32 %s1, 4
      %s31 = int_to_ptr.hbm [resolvable:$true] %s30
      %s32 = sshll.u32 [#allocation5], 4
      %s33 = int_to_ptr.vmem [resolvable:$true] %s32
      %35 = dma.hbm_to_vmem [thread:$0]  %s31, 32, %s33, [#allocation6]
    $region9: #{tpu_custom_call.1} parent=1 // pred_fallthru
      _
    // Predicated region
    $region10: #{tpu_custom_call.1} parent=1 // pred_check
      _
    $region11: #{tpu_custom_call.1} parent=1 // pred_check_branch
      %37 = sbr.rel (0) target = $region13
    $region12: #{tpu_custom_call.1} parent=1 // pred_region
      %39 = vsyncadd [#allocation6], 0
      %s40 = sshll.u32 %s2, 4
      %s41 = int_to_ptr.hbm [resolvable:$true] %s40
      %s42 = sshll.u32 [#allocation7], 4
      %s43 = int_to_ptr.vmem [resolvable:$true] %s42
      %48 = dma.hbm_to_vmem [thread:$0]  %s41, 1024, %s43, [#allocation6], 64, 64, 4
    $region13: #{tpu_custom_call.1} parent=1 // pred_fallthru
      _
    // Predicated region
    $region14: #{tpu_custom_call.1} parent=1 // pred_check
      _
    $region15: #{tpu_custom_call.1} parent=1 // pred_check_branch
      %50 = sbr.rel (0) target = $region17
    $region16: #{tpu_custom_call.1} parent=1 // pred_region
      _
    $region17: #{tpu_custom_call.1} parent=1 // pred_fallthru
      _
    // Predicated region
    $region18: #{tpu_custom_call.1} parent=1 // pred_check
      _
    $region19: #{tpu_custom_call.1} parent=1 // pred_check_branch
      %52 = sbr.rel (0) target = $region21
    $region20: #{tpu_custom_call.1} parent=1 // pred_region
      %54 = dma.done [#allocation3], 256
    $region21: #{tpu_custom_call.1} parent=1 // pred_fallthru
      _
    // Predicated region
    $region22: #{tpu_custom_call.1} parent=1 // pred_check
      _
    $region23: #{tpu_custom_call.1} parent=1 // pred_check_branch
      %56 = sbr.rel (0) target = $region25
    $region24: #{tpu_custom_call.1} parent=1 // pred_region
      %58 = dma.done [#allocation6], 32
    $region25: #{tpu_custom_call.1} parent=1 // pred_fallthru
      _
    // Predicated region
    $region26: #{tpu_custom_call.1} parent=1 // pred_check
      _
    $region27: #{tpu_custom_call.1} parent=1 // pred_check_branch
      %60 = sbr.rel (0) target = $region29
    $region28: #{tpu_custom_call.1} parent=1 // pred_region
      %62 = dma.done [#allocation6], 1024
    $region29: #{tpu_custom_call.1} parent=1 // pred_fallthru
      _
    %v63 = vld [vmem:[#allocation2] sm:$0xf]
    %v64 = vld [vmem:[#allocation2 + $0x4] sm:$0xf]
    %v65 = vld [vmem:[#allocation2 + $0x8] sm:$0xf]
    %v66 = vld [vmem:[#allocation2 + $0xc] sm:$0xf]
    %v67 = vld [vmem:[#allocation7] sm:$0xf]
    %v68 = vld [vmem:[#allocation7 + $0x4] sm:$0xf]
    %v69 = vld [vmem:[#allocation7 + $0x8] sm:$0xf]
    %v70 = vld [vmem:[#allocation7 + $0xc] sm:$0xf]
    %v71 = vld [vmem:[#allocation7 + $0x10] sm:$0xf]
    %v72 = vld [vmem:[#allocation7 + $0x14] sm:$0xf]
    %v73 = vld [vmem:[#allocation7 + $0x18] sm:$0xf]
    %v74 = vld [vmem:[#allocation7 + $0x1c] sm:$0xf]
    %v75 = vld [vmem:[#allocation7 + $0x20] sm:$0xf]
    %v76 = vld [vmem:[#allocation7 + $0x24] sm:$0xf]
    %v77 = vld [vmem:[#allocation7 + $0x28] sm:$0xf]
    %v78 = vld [vmem:[#allocation7 + $0x2c] sm:$0xf]
    %v79 = vld [vmem:[#allocation7 + $0x30] sm:$0xf]
    %v80 = vld [vmem:[#allocation7 + $0x34] sm:$0xf]
    %v81 = vld [vmem:[#allocation7 + $0x38] sm:$0xf]
    %v82 = vld [vmem:[#allocation7 + $0x3c] sm:$0xf]
    %v87 = vunpack.c.l.b16 %v63
    %v88 = vunpack.c.l.b16 %v64
    %v89 = vunpack.c.l.b16 %v65
    %v90 = vunpack.c.l.b16 %v66
    %v91 = vpack.c.b16 %v88, %v87
    %v92 = vpack.c.b16 %v90, %v89
    %v111 = vunpack.c.l.b16 %v67
    %v112 = vunpack.c.l.b16 %v68
    %v113 = vunpack.c.l.b16 %v69
    %v114 = vunpack.c.l.b16 %v70
    %v115 = vunpack.c.l.b16 %v71
    %v116 = vunpack.c.l.b16 %v72
    %v117 = vunpack.c.l.b16 %v73
    %v118 = vunpack.c.l.b16 %v74
    %v119 = vunpack.c.l.b16 %v75
    %v120 = vunpack.c.l.b16 %v76
    %v121 = vunpack.c.l.b16 %v77
    %v122 = vunpack.c.l.b16 %v78
    %v123 = vunpack.c.l.b16 %v79
    %v124 = vunpack.c.l.b16 %v80
    %v125 = vunpack.c.l.b16 %v81
    %v126 = vunpack.c.l.b16 %v82
    %v127 = vpack.c.b16 %v112, %v111
    %v128 = vpack.c.b16 %v114, %v113
    %v129 = vpack.c.b16 %v116, %v115
    %v130 = vpack.c.b16 %v118, %v117
    %v131 = vpack.c.b16 %v120, %v119
    %v132 = vpack.c.b16 %v122, %v121
    %v133 = vpack.c.b16 %v124, %v123
    %v134 = vpack.c.b16 %v126, %v125
    %143 = vmatpush.bf16.msra.mxu0 %v134
    %144 = vmatpush.bf16.msra.mxu0 %v133
    %145 = vmatpush.bf16.msra.mxu0 %v132
    %146 = vmatpush.bf16.msra.mxu0 %v131
    %147 = vmatpush.bf16.msra.mxu0 %v130
    %148 = vmatpush.bf16.msra.mxu0 %v129
    %149 = vmatpush.bf16.msra.mxu0 %v128
    %150 = vmatpush.bf16.msra.mxu0 %v127
    %151 = vmatmul.bf16.gmra.mxu0 %v91
    %v152 = vpop.f32.mrf.mxu0
    %v153 = vadd.f32 0.0, %v152
    %v154 = vpop.f32.mrf.mxu0
    %v155 = vadd.f32 0.0, %v154
    %156 = vmatmul.bf16.gmra.mxu0 %v92
    %v157 = vpop.f32.mrf.mxu0
    %v158 = vadd.f32 0.0, %v157
    %v159 = vpop.f32.mrf.mxu0
    %v160 = vadd.f32 0.0, %v159
    %161 = vdwg.mxu0
    %v162 = vld [vmem:[#allocation5] sm:$0x3]
    %v164 = vrot.slane %v162, 1
    %v165 = vperm.slane %v162, 0
    %v166 = vperm.slane %v164, 0
    %v169 = vadd.f32 %v153, %v165
    %v170 = vadd.f32 %v155, %v165
    %v171 = vadd.f32 %v158, %v166
    %v172 = vadd.f32 %v160, %v166
    %v173 = vtanh.pop %v169
    %v174 = vtanh.pop %v170
    %v175 = vtanh.pop %v171
    %v176 = vtanh.pop %v172
    %v177 = vld [vmem:[%s3] sm:$0x1]
    %v179 = vperm.slane %v177, 0
    %v181 = vmul.f32 %v173, %v179
    %v182 = vmul.f32 %v174, %v179
    %v183 = vmul.f32 %v175, %v179
    %v184 = vmul.f32 %v176, %v179
    %185 = vadd.xlane.f32.xlu0 %v181
    %v186 = vpop.xlane.xlu0 %185
    %187 = vadd.xlane.f32.xlu0 %v182
    %v188 = vpop.xlane.xlu0 %187
    %189 = vadd.xlane.f32.xlu0 %v183
    %v190 = vpop.xlane.xlu0 %189
    %191 = vadd.xlane.f32.xlu0 %v184
    %v192 = vpop.xlane.xlu0 %191
    %v197 = vlaneseq
    %v198 = vand.u32 %v197, 127
    %v199 = vperm.slane %v186, %v198
    %v200 = vadd.s32 %v198, 4294967288
    %v201 = vperm.slane %v188, %v200
    %vm202 = vcmask 130112
    %v203 = vsel %vm202, %v201, %v199
    %v204 = vperm.slane %v190, %v198
    %v205 = vperm.slane %v192, %v200
    %v206 = vsel %vm202, %v205, %v204
    %vm207 = vcmask 1041409
    %v208 = vsel %vm207, %v206, %v203
    %vm210 = vcmask 123904
    %v211 = vsel %vm210, %v208, -inf
    %212 = vmax.xlane.f32.xlu0 %v211
    %v213 = vpop.xlane.xlu0 %212
    %v215 = vperm.slane %v213, 0
    %v216 = vperm.slane %v213, 1
    %v219 = vsub.f32 %v186, %v215
    %v220 = vsub.f32 %v188, %v215
    %v221 = vsub.f32 %v190, %v216
    %v222 = vsub.f32 %v192, %v216
    %v223 = vmul.f32 %v219, 1.442695
    %v224 = vpow.pop %v223
    %v225 = vmul.f32 %v220, 1.442695
    %v226 = vpow.pop %v225
    %v227 = vmul.f32 %v221, 1.442695
    %v228 = vpow.pop %v227
    %v229 = vmul.f32 %v222, 1.442695
    %v230 = vpow.pop %v229
    %235 = vset.pattern.permute.xlu0 0
    %236 = vperm.xlu0 %235, %v224
    %v237 = vpop.permute.xlu0 %236
    %238 = vset.pattern.permute.xlu0 0
    %239 = vperm.xlu0 %238, %v226
    %v240 = vpop.permute.xlu0 %239
    %241 = vset.pattern.permute.xlu0 0
    %242 = vperm.xlu0 %241, %v228
    %v243 = vpop.permute.xlu0 %242
    %244 = vset.pattern.permute.xlu0 0
    %245 = vperm.xlu0 %244, %v230
    %v246 = vpop.permute.xlu0 %245
    %v247 = vperm.slane %v237, %v198
    %v248 = vperm.slane %v240, %v200
    %v249 = vsel %vm202, %v248, %v247
    %v250 = vperm.slane %v243, %v198
    %v251 = vperm.slane %v246, %v200
    %v252 = vsel %vm202, %v251, %v250
    %v253 = vsel %vm207, %v252, %v249
    %v255 = vsel %vm210, %v253, 0.0
    %256 = vadd.xlane.f32.xlu0 %v255
    %v257 = vpop.xlane.xlu0 %256
    %v258 = vrcp.pop %v257
    %v260 = vperm.slane %v258, 0
    %v261 = vperm.slane %v258, 1
    %v264 = vmul.f32 %v224, %v260
    %v265 = vmul.f32 %v226, %v260
    %v266 = vmul.f32 %v228, %v261
    %v267 = vmul.f32 %v230, %v261
    %v268 = vunpack.c.l.bf16 %v63
    %v269 = vunpack.c.l.bf16 %v64
    %v270 = vunpack.c.l.bf16 %v65
    %v271 = vunpack.c.l.bf16 %v66
    %273 = vset.pattern.permute.xlu0 0
    %274 = vperm.xlu0 %273, %v264
    %v275 = vpop.permute.xlu0 %274
    %278 = vset.pattern.permute.xlu0 0
    %279 = vperm.xlu0 %278, %v265
    %v280 = vpop.permute.xlu0 %279
    %283 = vset.pattern.permute.xlu0 0
    %284 = vperm.xlu0 %283, %v266
    %v285 = vpop.permute.xlu0 %284
    %288 = vset.pattern.permute.xlu0 0
    %289 = vperm.xlu0 %288, %v267
    %v290 = vpop.permute.xlu0 %289
    %v292 = vmul.f32 %v275, %v268
    %v293 = vmul.f32 %v280, %v269
    %v294 = vmul.f32 %v285, %v270
    %v295 = vmul.f32 %v290, %v271
    %v296 = vadd.f32 %v292, %v293
    %v297 = vrot.slane %v296, 4
    %v298 = vadd.f32 %v296, %v297
    %v299 = vrot.slane %v298, 2
    %v300 = vadd.f32 %v298, %v299
    %v301 = vrot.slane %v300, 1
    %v302 = vadd.f32 %v300, %v301
    %v303 = vadd.f32 %v294, %v295
    %v304 = vrot.slane %v303, 4
    %v305 = vadd.f32 %v303, %v304
    %v306 = vrot.slane %v305, 2
    %v307 = vadd.f32 %v305, %v306
    %v308 = vrot.slane %v307, 1
    %v309 = vadd.f32 %v307, %v308
    %v312 = vsel %vm207, %v309, %v302
    %314 = vst [vmem:[#allocation8] sm:$0x3] %v312
    // Predicated region
    $region30: #{tpu_custom_call.1} parent=1 // pred_check
      _
    $region31: #{tpu_custom_call.1} parent=1 // pred_check_branch
      %316 = sbr.rel (0) target = $region33
    $region32: #{tpu_custom_call.1} parent=1 // pred_region
      %318 = vsyncadd [#allocation4], 0
      %s320 = sshll.u32 [#allocation8], 4
      %s321 = int_to_ptr.vmem [resolvable:$true] %s320
      %s322 = sshll.u32 %s4, 4
      %s323 = int_to_ptr.hbm [resolvable:$true] %s322
      %325 = dma.vmem_to_hbm [thread:$0]  %s321, 32, %s323, [#allocation4]
    $region33: #{tpu_custom_call.1} parent=1 // pred_fallthru
      _
    // Predicated region
    $region34: #{tpu_custom_call.1} parent=1 // pred_check
      _
    $region35: #{tpu_custom_call.1} parent=1 // pred_check_branch
      %327 = sbr.rel (0) target = $region37
    $region36: #{tpu_custom_call.1} parent=1 // pred_region
      %329 = dma.done [#allocation4], 32
    $region37: #{tpu_custom_call.1} parent=1 // pred_fallthru
      _
    %330 = vsyncpa [#allocation3], 1
    %331 = vsyncpa [#allocation6], 1
    %332 = vsyncpa [#allocation4], 1

</llo_original>
